<compile_context>
chip_gen: v6e
topology: v6e:2x2x1
jax: 0.10.0
libtpu: 0.0.40
codegen_flags: <defaults>
</compile_context>

<pallas_src>
import functools

import jax
import jax.numpy as jnp
from jax import lax
from jax.experimental import pallas as pl
from jax.experimental.pallas import tpu as pltpu


def _round_up(n, m):
    return ((n + m - 1) // m) * m


def _mlp_kernel(*refs, activations, compute_dtype):
    """Fused MLP forward on one batch tile.

    refs = (x_ref, w1_ref, b1_ref, ..., wL_ref, bL_ref, o_ref)
      x_ref : (tile_b, d_in)     natural batch-major layout (no wrapper transpose)
      w_ref : (out_l, in_l)      PyTorch weight layout; resident (constant index_map)
      b_ref : (out_l, 1)         f32
      o_ref : (tile_b, d_out)    natural batch-major output
    Intermediate activations are kept lane-dense as (features, tile_b).
    """
    x_ref = refs[0]
    o_ref = refs[-1]
    p_refs = refs[1:-1]

    # First layer: contract the feature axis of the batch-major x block directly,
    # producing a lane-dense (d1, tile_b) activation.  bf16/f32 operands go straight
    # to the MXU with f32 accumulation (no upcast of x / w).
    x = x_ref[...].astype(compute_dtype)
    w = p_refs[0][...]
    b = p_refs[1][...]
    h = lax.dot_general(w, x, (((1,), (1,)), ((), ())),
                        preferred_element_type=jnp.float32)
    h = h + b
    if activations[0] is not None:
        h = activations[0](h)                      # f32 activation math (v5e-safe)

    for layer in range(1, len(activations)):
        w = p_refs[2 * layer][...]
        b = p_refs[2 * layer + 1][...]
        h = jnp.dot(w, h.astype(compute_dtype),
                    preferred_element_type=jnp.float32)
        h = h + b
        if activations[layer] is not None:
            h = activations[layer](h)

    # (d_out, tile_b) -> (tile_b, d_out): tiny transpose on the XLU slot, then store.
    o_ref[...] = jnp.transpose(h).astype(o_ref.dtype)


def ffnn_forward(x, params, activations, *, tile_b=4096, io_dtype=None, out_dtype=None):
    """Fused MLP forward.

    x:            (B, d_in), batch-major (PyTorch convention).  Pass bf16 x to halve input traffic.
    params:       list of (W, b) with W of shape (in, out), b of shape (1, out) (or (out,)).
    activations:  list of optional elementwise callables, one per layer.
    tile_b:       requested batch tile (rounded to a multiple of 128, VMEM/megacore-clamped).
    io_dtype:     dtype fed to the MXU and used to stream weights / store the output (e.g. bf16).
                  Accumulation is always f32.  Defaults to x.dtype.
    out_dtype:    output storage dtype; defaults to io_dtype (or x.dtype).
    """
    assert len(params) == len(activations)
    B, d_in = x.shape
    d_out = int(params[-1][0].shape[1])

    compute_dtype = jnp.dtype(io_dtype) if io_dtype is not None else jnp.dtype(x.dtype)
    out_dtype = jnp.dtype(out_dtype) if out_dtype is not None else compute_dtype

    x_itemsize = jnp.dtype(x.dtype).itemsize
    w_itemsize = compute_dtype.itemsize
    out_itemsize = out_dtype.itemsize

    # ---- batch tile selection --------------------------------------------------------------
    tile_b = _round_up(max(128, int(tile_b)), 128)        # lane-dense: multiple of 128
    tile_b = min(tile_b, _round_up(B, 128))                # never larger than (rounded) batch

    # VMEM-aware clamp: ~3/8 of physical VMEM (≈24 MiB on v7x, ≈48 MiB on v5e/v6e).
    try:
        vmem_cap = int(pltpu.get_tpu_info().vmem_capacity_bytes)
    except Exception:  # pragma: no cover - conservative fallback (v7x-sized)
        vmem_cap = 64 << 20
    vmem_budget = (vmem_cap * 3) // 8
    param_bytes_vmem = 2 * sum(int(w.size) * w_itemsize + int(b.size) * 4 for w, b in params)
    max_width = max(int(w.shape[1]) for w, _ in params)
    per_row_bytes = (2 * d_in * x_itemsize          # double-buffered input block
                     + 2 * d_out * out_itemsize     # double-buffered output block
                     + 2 * max_width * 4)           # f32 intermediates headroom
    avail = vmem_budget - param_bytes_vmem - (1 << 20)
    if avail > per_row_bytes * 128:
        tile_b = min(tile_b, (avail // per_row_bytes) // 128 * 128)
    else:
        tile_b = 128

    # Keep >=2 grid steps for medium/large batches so v7x's two TensorCores both get work.
    if B > 256 and pl.cdiv(B, tile_b) < 2:
        tile_b = max(128, _round_up(pl.cdiv(B, 2), 128))
    tile_b = max(128, int(tile_b))

    # No padding of x: partial last block overhangs (OOB reads are garbage rows, their
    # writes are dropped by the pipeline), saving an HBM copy of the input.
    grid = (pl.cdiv(B, tile_b),)

    # ---- operands & specs --------------------------------------------------------------------
    flat_params = []
    in_specs = [pl.BlockSpec((tile_b, d_in), lambda i: (i, 0))]
    for (w, b) in params:
        wt = jnp.asarray(w).T.astype(compute_dtype)           # (out, in)  == PyTorch layout
        bc = jnp.asarray(b).reshape(-1, 1).astype(jnp.float32)  # (out, 1)  f32 bias
        flat_params += [wt, bc]
        # Tiny, fully-resident blocks (same block index every step => no re-DMA).
        in_specs += [
            pl.BlockSpec(wt.shape, lambda i: (0, 0)),
            pl.BlockSpec(bc.shape, lambda i: (0, 0)),
        ]

    # ---- advisory cost estimate ----------------------------------------------------------------
    flops = 2 * B * sum(int(w.shape[0]) * int(w.shape[1]) for w, _ in params)
    transcendentals = B * sum(
        int(w.shape[1]) for (w, _), act in zip(params, activations) if act is not None
    )
    param_bytes = sum(int(w.size) * w_itemsize + int(b.size) * 4 for w, b in params)
    bytes_accessed = B * d_in * x_itemsize + B * d_out * out_itemsize + param_bytes

    est_vmem = per_row_bytes * tile_b + param_bytes_vmem + (2 << 20)
    vmem_limit = int(min((vmem_cap * 3) // 4, max(32 << 20, 2 * est_vmem)))

    out = pl.pallas_call(
        functools.partial(_mlp_kernel,
                          activations=tuple(activations),
                          compute_dtype=compute_dtype),
        out_shape=jax.ShapeDtypeStruct((B, d_out), out_dtype),
        grid_spec=pltpu.PrefetchScalarGridSpec(
            num_scalar_prefetch=0,
            grid=grid,
            in_specs=in_specs,
            out_specs=pl.BlockSpec((tile_b, d_out), lambda i: (i, 0)),
        ),
        compiler_params=pltpu.CompilerParams(
            dimension_semantics=("parallel",),
            vmem_limit_bytes=vmem_limit,
        ),
        cost_estimate=pl.CostEstimate(
            flops=int(flops),
            transcendentals=int(transcendentals),
            bytes_accessed=int(bytes_accessed),
        ),
    )(x, *flat_params)
    return out


def init_linear_params(key, neurons):
    """Deterministic init mimicking nn.Linear default (uniform +/- 1/sqrt(fan_in)).

    Returns list of (W, b) with W stored as (in_features, out_features)."""
    params = []
    for i in range(len(neurons) - 1):
        fan_in, fan_out = neurons[i], neurons[i + 1]
        key, kw, kb = jax.random.split(key, 3)
        bound = 1.0 / (fan_in ** 0.5)
        w = jax.random.uniform(kw, (fan_in, fan_out), jnp.float32, -bound, bound)
        b = jax.random.uniform(kb, (1, fan_out), jnp.float32, -bound, bound)
        params.append((w, b))
    return params


def ffnn_reference(x, params, activations):
    """Pure-JAX reference of FeedForwardNeuralNet._forward_pass."""
    h = x
    for (w, b), act in zip(params, activations):
        h = h @ w + b
        if act is not None:
            h = act(h)
    return h


if __name__ == "__main__":
    neurons = [16, 32, 32, 8]          # input_dim=16, hidden=32, output_dim=8
    activations = [jnp.tanh, jnp.tanh, None]

    key = jax.random.PRNGKey(0)
    key, kx = jax.random.split(key)
    params = init_linear_params(key, neurons)

    # --- small batch (grid=1, overhanging partial block) ---
    batch = 16
    x = jax.random.normal(kx, (batch, neurons[0]), dtype=jnp.float32)
    ref = ffnn_reference(x, params, activations)
    out = jax.block_until_ready(ffnn_forward(x, params, activations))
    assert out.shape == (batch, neurons[-1])
    assert jnp.allclose(out, ref, atol=1e-4, rtol=1e-4), "mismatch vs reference (f32, small batch)"

    # --- non-divisible batch: grid of 2 (megacore clamp) with an overhanging last tile ---
    batch2 = 300
    key, kx2 = jax.random.split(key)
    x2 = jax.random.normal(kx2, (batch2, neurons[0]), dtype=jnp.float32)
    ref2 = ffnn_reference(x2, params, activations)
    out2 = jax.block_until_ready(ffnn_forward(x2, params, activations))
    assert out2.shape == (batch2, neurons[-1])
    assert jnp.allclose(out2, ref2, atol=1e-4, rtol=1e-4), "mismatch vs reference (f32, B=300)"

    # --- bf16 I/O path: caller supplies bf16 x; weights fed to the MXU as bf16, output stored
    #     as bf16; accumulation / tanh stay f32 in-kernel.  Tolerance loosened for quantization.
    x_bf = x2.astype(jnp.bfloat16)
    out_bf = jax.block_until_ready(
        ffnn_forward(x_bf, params, activations, io_dtype=jnp.bfloat16))
    assert out_bf.shape == (batch2, neurons[-1])
    assert out_bf.dtype == jnp.bfloat16
    assert float(jnp.max(jnp.abs(out_bf.astype(jnp.float32) - ref2))) < 0.1, \
        "mismatch vs reference (bf16)"

    print("KERNEL_OK")
</pallas_src>

<mosaic_0001>
module attributes {stable_mosaic.version = 11 : i64} {
  func.func @_mlp_kernel(%arg0: i32, %arg1: memref<128x16xf32, #tpu.memory_space<vmem>>, %arg2: memref<32x16xf32, #tpu.memory_space<vmem>>, %arg3: memref<32x1xf32, #tpu.memory_space<vmem>>, %arg4: memref<32x32xf32, #tpu.memory_space<vmem>>, %arg5: memref<32x1xf32, #tpu.memory_space<vmem>>, %arg6: memref<8x32xf32, #tpu.memory_space<vmem>>, %arg7: memref<8x1xf32, #tpu.memory_space<vmem>>, %arg8: memref<128x8xf32, #tpu.memory_space<vmem>>) attributes {dimension_semantics = [#tpu.dimension_semantics<parallel>], iteration_bounds = array<i64: 1>, scalar_prefetch = 0 : i64, scratch_operands = 0 : i64, tpu.core_type = #tpu.core_type<tc>, window_params = [{transform_indices = @transform_0, window_bounds = array<i64: 128, 16>}, {pipeline_mode = #tpu.pipeline_mode<synchronous>, transform_indices = @transform_1, window_bounds = array<i64: 32, 16>}, {pipeline_mode = #tpu.pipeline_mode<synchronous>, transform_indices = @transform_2, window_bounds = array<i64: 32, 1>}, {pipeline_mode = #tpu.pipeline_mode<synchronous>, transform_indices = @transform_3, window_bounds = array<i64: 32, 32>}, {pipeline_mode = #tpu.pipeline_mode<synchronous>, transform_indices = @transform_4, window_bounds = array<i64: 32, 1>}, {pipeline_mode = #tpu.pipeline_mode<synchronous>, transform_indices = @transform_5, window_bounds = array<i64: 8, 32>}, {pipeline_mode = #tpu.pipeline_mode<synchronous>, transform_indices = @transform_6, window_bounds = array<i64: 8, 1>}, {transform_indices = @transform_7, window_bounds = array<i64: 128, 8>}]} {
    %c0 = arith.constant 0 : index
    %c0_0 = arith.constant 0 : index
    %0 = vector.load %arg1[%c0, %c0_0] : memref<128x16xf32, #tpu.memory_space<vmem>>, vector<128x16xf32>
    %c0_1 = arith.constant 0 : index
    %c0_2 = arith.constant 0 : index
    %1 = vector.load %arg2[%c0_1, %c0_2] : memref<32x16xf32, #tpu.memory_space<vmem>>, vector<32x16xf32>
    %c0_3 = arith.constant 0 : index
    %c0_4 = arith.constant 0 : index
    %2 = vector.load %arg3[%c0_3, %c0_4] : memref<32x1xf32, #tpu.memory_space<vmem>>, vector<32x1xf32>
    %cst = arith.constant dense<0.000000e+00> : vector<32x128xf32>
    %3 = tpu.matmul %1, %0, %cst {dimension_numbers = #tpu.dot_dimension_numbers<[1], [1], [0], [0], [0, 0, 1, 0], [], []>} : vector<32x16xf32>, vector<128x16xf32>, vector<32x128xf32> -> vector<32x128xf32>
    %4 = vector.broadcast %2 : vector<32x1xf32> to vector<32x128xf32>
    %5 = arith.addf %3, %4 : vector<32x128xf32>
    %6 = math.tanh %5 : vector<32x128xf32>
    %c0_5 = arith.constant 0 : index
    %c0_6 = arith.constant 0 : index
    %7 = vector.load %arg4[%c0_5, %c0_6] : memref<32x32xf32, #tpu.memory_space<vmem>>, vector<32x32xf32>
    %c0_7 = arith.constant 0 : index
    %c0_8 = arith.constant 0 : index
    %8 = vector.load %arg5[%c0_7, %c0_8] : memref<32x1xf32, #tpu.memory_space<vmem>>, vector<32x1xf32>
    %cst_9 = arith.constant dense<0.000000e+00> : vector<32x128xf32>
    %9 = tpu.matmul %7, %6, %cst_9 {dimension_numbers = #tpu.dot_dimension_numbers<[1], [0], [0], [1], [0, 0, 1, 1], [], []>} : vector<32x32xf32>, vector<32x128xf32>, vector<32x128xf32> -> vector<32x128xf32>
    %10 = vector.broadcast %8 : vector<32x1xf32> to vector<32x128xf32>
    %11 = arith.addf %9, %10 : vector<32x128xf32>
    %12 = math.tanh %11 : vector<32x128xf32>
    %c0_10 = arith.constant 0 : index
    %c0_11 = arith.constant 0 : index
    %13 = vector.load %arg6[%c0_10, %c0_11] : memref<8x32xf32, #tpu.memory_space<vmem>>, vector<8x32xf32>
    %c0_12 = arith.constant 0 : index
    %c0_13 = arith.constant 0 : index
    %14 = vector.load %arg7[%c0_12, %c0_13] : memref<8x1xf32, #tpu.memory_space<vmem>>, vector<8x1xf32>
    %cst_14 = arith.constant dense<0.000000e+00> : vector<8x128xf32>
    %15 = tpu.matmul %13, %12, %cst_14 {dimension_numbers = #tpu.dot_dimension_numbers<[1], [0], [0], [1], [0, 0, 1, 1], [], []>} : vector<8x32xf32>, vector<32x128xf32>, vector<8x128xf32> -> vector<8x128xf32>
    %16 = vector.broadcast %14 : vector<8x1xf32> to vector<8x128xf32>
    %17 = arith.addf %15, %16 : vector<8x128xf32>
    %18 = tpu.transpose %17, [1, 0] : vector<8x128xf32> -> vector<128x8xf32>
    %c0_15 = arith.constant 0 : index
    %c0_16 = arith.constant 0 : index
    %19 = vector.load %arg8[%c0_15, %c0_16] : memref<128x8xf32, #tpu.memory_space<vmem>>, vector<128x8xf32>
    tpu.vector_store %arg8[%c0_15, %c0_16], %18 {strides = array<i32>} : memref<128x8xf32, #tpu.memory_space<vmem>>, vector<128x8xf32>,
    return
  }
  func.func @transform_0(%arg0: i32) -> (i32, i32) {
    %c0_i32 = arith.constant 0 : i32
    %c0_i32_0 = arith.constant 0 : i32
    return %arg0, %c0_i32 : i32, i32
  }
  func.func @transform_1(%arg0: i32) -> (i32, i32) {
    %c0_i32 = arith.constant 0 : i32
    %c0_i32_0 = arith.constant 0 : i32
    %c0_i32_1 = arith.constant 0 : i32
    return %c0_i32, %c0_i32_0 : i32, i32
  }
  func.func @transform_2(%arg0: i32) -> (i32, i32) {
    %c0_i32 = arith.constant 0 : i32
    %c0_i32_0 = arith.constant 0 : i32
    %c0_i32_1 = arith.constant 0 : i32
    return %c0_i32, %c0_i32_0 : i32, i32
  }
  func.func @transform_3(%arg0: i32) -> (i32, i32) {
    %c0_i32 = arith.constant 0 : i32
    %c0_i32_0 = arith.constant 0 : i32
    %c0_i32_1 = arith.constant 0 : i32
    return %c0_i32, %c0_i32_0 : i32, i32
  }
  func.func @transform_4(%arg0: i32) -> (i32, i32) {
    %c0_i32 = arith.constant 0 : i32
    %c0_i32_0 = arith.constant 0 : i32
    %c0_i32_1 = arith.constant 0 : i32
    return %c0_i32, %c0_i32_0 : i32, i32
  }
  func.func @transform_5(%arg0: i32) -> (i32, i32) {
    %c0_i32 = arith.constant 0 : i32
    %c0_i32_0 = arith.constant 0 : i32
    %c0_i32_1 = arith.constant 0 : i32
    return %c0_i32, %c0_i32_0 : i32, i32
  }
  func.func @transform_6(%arg0: i32) -> (i32, i32) {
    %c0_i32 = arith.constant 0 : i32
    %c0_i32_0 = arith.constant 0 : i32
    %c0_i32_1 = arith.constant 0 : i32
    return %c0_i32, %c0_i32_0 : i32, i32
  }
  func.func @transform_7(%arg0: i32) -> (i32, i32) {
    %c0_i32 = arith.constant 0 : i32
    %c0_i32_0 = arith.constant 0 : i32
    return %arg0, %c0_i32 : i32, i32
  }
}

</mosaic_0001>

<llo_original>
// kernel: tpu_custom_call.1
$region0: #{tpu_custom_call.1}
  #allocation0 [shape = 'u32[]', space=smem, size = 0x4, offset = 0x4, fixed_abs, tag = 'smem constant byte address 0x4 - core index']
  #allocation1 [shape = 'u32[144,128]{1,0:T(1,128)}', space=vmem, size = 0x12000, scoped, tag = 'internal scratch']
  %s0 = inlined_call_operand.vmem [shape: f32[16,16], index: 0, kind: input, shape index: {}]
  %s1 = inlined_call_operand.vmem [shape: f32[32,16], index: 1, kind: input, shape index: {}]
  %s2 = inlined_call_operand.vmem [shape: f32[32,1], index: 2, kind: input, shape index: {}]
  %s3 = inlined_call_operand.vmem [shape: f32[32,32], index: 3, kind: input, shape index: {}]
  %s4 = inlined_call_operand.vmem [shape: f32[32,1], index: 4, kind: input, shape index: {}]
  %s5 = inlined_call_operand.vmem [shape: f32[8,32], index: 5, kind: input, shape index: {}]
  %s6 = inlined_call_operand.vmem [shape: f32[8,1], index: 6, kind: input, shape index: {}]
  %s7 = inlined_call_operand.vmem [shape: f32[16,8], index: 7, kind: output, shape index: {}]
  %s8 = sld [smem:[#allocation0]]
  $region72: #{tpu_custom_call.1} parent=0
    _
  %s10 = ssub.s32 1, %s8
  %s11 = scalar_select 0, %s10, %s8
  $region1: #{tpu_custom_call.1} parent=0
    #allocation2 [shape = 'u8[65536]{0}', space=vmem, size = 0x10000, scoped, tag = 'output window, operand 0, single buffered']
    // Predicated region
    $region2: #{tpu_custom_call.1} parent=1 // pred_check
      _
    $region3: #{tpu_custom_call.1} parent=1 // pred_check_branch
      %13 = sbr.rel (0) target = $region5
    $region4: #{tpu_custom_call.1} parent=1 // pred_region
      _
    $region5: #{tpu_custom_call.1} parent=1 // pred_fallthru
      _
    // Predicated region
    $region6: #{tpu_custom_call.1} parent=1 // pred_check
      _
    $region7: #{tpu_custom_call.1} parent=1 // pred_check_branch
      %15 = sbr.rel (0) target = $region9
    $region8: #{tpu_custom_call.1} parent=1 // pred_region
      _
    $region9: #{tpu_custom_call.1} parent=1 // pred_fallthru
      _
    // Predicated region
    $region10: #{tpu_custom_call.1} parent=1 // pred_check
      _
    $region11: #{tpu_custom_call.1} parent=1 // pred_check_branch
      %17 = sbr.rel (0) target = $region13
    $region12: #{tpu_custom_call.1} parent=1 // pred_region
      _
    $region13: #{tpu_custom_call.1} parent=1 // pred_fallthru
      _
    // Predicated region
    $region14: #{tpu_custom_call.1} parent=1 // pred_check
      _
    $region15: #{tpu_custom_call.1} parent=1 // pred_check_branch
      %19 = sbr.rel (0) target = $region17
    $region16: #{tpu_custom_call.1} parent=1 // pred_region
      _
    $region17: #{tpu_custom_call.1} parent=1 // pred_fallthru
      _
    // Predicated region
    $region18: #{tpu_custom_call.1} parent=1 // pred_check
      _
    $region19: #{tpu_custom_call.1} parent=1 // pred_check_branch
      %21 = sbr.rel (0) target = $region21
    $region20: #{tpu_custom_call.1} parent=1 // pred_region
      _
    $region21: #{tpu_custom_call.1} parent=1 // pred_fallthru
      _
    // Predicated region
    $region22: #{tpu_custom_call.1} parent=1 // pred_check
      _
    $region23: #{tpu_custom_call.1} parent=1 // pred_check_branch
      %23 = sbr.rel (0) target = $region25
    $region24: #{tpu_custom_call.1} parent=1 // pred_region
      _
    $region25: #{tpu_custom_call.1} parent=1 // pred_fallthru
      _
    // Predicated region
    $region26: #{tpu_custom_call.1} parent=1 // pred_check
      _
    $region27: #{tpu_custom_call.1} parent=1 // pred_check_branch
      %25 = sbr.rel (0) target = $region29
    $region28: #{tpu_custom_call.1} parent=1 // pred_region
      _
    $region29: #{tpu_custom_call.1} parent=1 // pred_fallthru
      _
    %v26 = vld [vmem:[%s0] sm:$0xff]
    %v27 = vld [vmem:[%s0 + $0x8] sm:$0xff]
    %v28 = vld [vmem:[%s0 + $0x10] sm:$0xff]
    %v29 = vld [vmem:[%s0 + $0x18] sm:$0xff]
    %v30 = vld [vmem:[%s0 + $0x20] sm:$0xff]
    %v31 = vld [vmem:[%s0 + $0x28] sm:$0xff]
    %v32 = vld [vmem:[%s0 + $0x30] sm:$0xff]
    %v33 = vld [vmem:[%s0 + $0x38] sm:$0xff]
    %v34 = vld [vmem:[%s0 + $0x40] sm:$0xff]
    %v35 = vld [vmem:[%s0 + $0x48] sm:$0xff]
    %v36 = vld [vmem:[%s0 + $0x50] sm:$0xff]
    %v37 = vld [vmem:[%s0 + $0x58] sm:$0xff]
    %v38 = vld [vmem:[%s0 + $0x60] sm:$0xff]
    %v39 = vld [vmem:[%s0 + $0x68] sm:$0xff]
    %v40 = vld [vmem:[%s0 + $0x70] sm:$0xff]
    %v41 = vld [vmem:[%s0 + $0x78] sm:$0xff]
    %v42 = vld [vmem:[%s1] sm:$0xff]
    %v43 = vld [vmem:[%s1 + $0x8] sm:$0xff]
    %v44 = vld [vmem:[%s1 + $0x10] sm:$0xff]
    %v45 = vld [vmem:[%s1 + $0x18] sm:$0xff]
    %v46 = vld [vmem:[%s2] sm:$0xff]
    %v47 = vld [vmem:[%s2 + $0x8] sm:$0xff]
    %v48 = vld [vmem:[%s2 + $0x10] sm:$0xff]
    %v49 = vld [vmem:[%s2 + $0x18] sm:$0xff]
    %51 = vset.pattern.permute.xlu0 0
    %52 = vperm.xlu0 %51, %v46
    %v53 = vpop.permute.xlu0 %52
    %56 = vset.pattern.permute.xlu0 0
    %57 = vperm.xlu0 %56, %v47
    %v58 = vpop.permute.xlu0 %57
    %61 = vset.pattern.permute.xlu0 0
    %62 = vperm.xlu0 %61, %v48
    %v63 = vpop.permute.xlu0 %62
    %66 = vset.pattern.permute.xlu0 0
    %67 = vperm.xlu0 %66, %v49
    %v68 = vpop.permute.xlu0 %67
    %vm70 = vcmask 130048
    %v72 = vsel %vm70, %v42, 0
    %v75 = vsel %vm70, %v43, 0
    %v78 = vsel %vm70, %v44, 0
    %v81 = vsel %vm70, %v45, 0
    %v84 = vsel %vm70, %v26, 0
    %v87 = vsel %vm70, %v27, 0
    %v90 = vsel %vm70, %v28, 0
    %v93 = vsel %vm70, %v29, 0
    %v96 = vsel %vm70, %v30, 0
    %v99 = vsel %vm70, %v31, 0
    %v102 = vsel %vm70, %v32, 0
    %v105 = vsel %vm70, %v33, 0
    %v108 = vsel %vm70, %v34, 0
    %v111 = vsel %vm70, %v35, 0
    %v114 = vsel %vm70, %v36, 0
    %v117 = vsel %vm70, %v37, 0
    %v120 = vsel %vm70, %v38, 0
    %v123 = vsel %vm70, %v39, 0
    %v126 = vsel %vm70, %v40, 0
    %v129 = vsel %vm70, %v41, 0
    %131 = vmatprep.subr.mxu0 0.0
    %132 = vmatpush1.xpose.msra.mxu0 %v129
    %133 = vmatprep.subr.mxu0 0.0
    %134 = vmatpush1.xpose.msra.mxu0 %v126
    %135 = vmatprep.subr.mxu0 0.0
    %136 = vmatpush1.xpose.msra.mxu0 %v123
    %137 = vmatprep.subr.mxu0 0.0
    %138 = vmatpush1.xpose.msra.mxu0 %v120
    %139 = vmatprep.subr.mxu0 0.0
    %140 = vmatpush1.xpose.msra.mxu0 %v117
    %141 = vmatprep.subr.mxu0 0.0
    %142 = vmatpush1.xpose.msra.mxu0 %v114
    %143 = vmatprep.subr.mxu0 0.0
    %144 = vmatpush1.xpose.msra.mxu0 %v111
    %145 = vmatprep.subr.mxu0 0.0
    %146 = vmatpush1.xpose.msra.mxu0 %v108
    %147 = vmatprep.subr.mxu0 0.0
    %148 = vmatpush1.xpose.msra.mxu0 %v105
    %149 = vmatprep.subr.mxu0 0.0
    %150 = vmatpush1.xpose.msra.mxu0 %v102
    %151 = vmatprep.subr.mxu0 0.0
    %152 = vmatpush1.xpose.msra.mxu0 %v99
    %153 = vmatprep.subr.mxu0 0.0
    %154 = vmatpush1.xpose.msra.mxu0 %v96
    %155 = vmatprep.subr.mxu0 0.0
    %156 = vmatpush1.xpose.msra.mxu0 %v93
    %157 = vmatprep.subr.mxu0 0.0
    %158 = vmatpush1.xpose.msra.mxu0 %v90
    %159 = vmatprep.subr.mxu0 0.0
    %160 = vmatpush1.xpose.msra.mxu0 %v87
    %161 = vmatprep.subr.mxu0 0.0
    %162 = vmatpush1.xpose.msra.mxu0 %v84
    %163 = vmatprep.subr.mxu0 0.0
    %164 = vmatpush2.xpose.msra.mxu0 0.0
    %165 = vmatprep.subr.mxu0 0.0
    %166 = vmatpush2.xpose.msra.mxu0 0.0
    %167 = vmatprep.subr.mxu0 0.0
    %168 = vmatpush2.xpose.msra.mxu0 0.0
    %169 = vmatprep.subr.mxu0 0.0
    %170 = vmatpush2.xpose.msra.mxu0 0.0
    %171 = vmatprep.subr.mxu0 0.0
    %172 = vmatpush2.xpose.msra.mxu0 0.0
    %173 = vmatprep.subr.mxu0 0.0
    %174 = vmatpush2.xpose.msra.mxu0 0.0
    %175 = vmatprep.subr.mxu0 0.0
    %176 = vmatpush2.xpose.msra.mxu0 0.0
    %177 = vmatprep.subr.mxu0 0.0
    %178 = vmatpush2.xpose.msra.mxu0 0.0
    %179 = vmatprep.subr.mxu0 0.0
    %180 = vmatpush2.xpose.msra.mxu0 0.0
    %181 = vmatprep.subr.mxu0 0.0
    %182 = vmatpush2.xpose.msra.mxu0 0.0
    %183 = vmatprep.subr.mxu0 0.0
    %184 = vmatpush2.xpose.msra.mxu0 0.0
    %185 = vmatprep.subr.mxu0 0.0
    %186 = vmatpush2.xpose.msra.mxu0 0.0
    %187 = vmatprep.subr.mxu0 0.0
    %188 = vmatpush2.xpose.msra.mxu0 0.0
    %189 = vmatprep.subr.mxu0 0.0
    %190 = vmatpush2.xpose.msra.mxu0 0.0
    %191 = vmatprep.subr.mxu0 0.0
    %192 = vmatpush2.xpose.msra.mxu0 0.0
    %193 = vmatprep.subr.mxu0 0.0
    %194 = vmatpush2.xpose.msra.mxu0 0.0
    %195 = vmatprep.mubr.f32.mxu0 0.0
    %196 = vmatmul.mubr.f32.gmra.mxu0 %v72
    %v197 = vpop.f32.mrf.mxu0
    %v198 = vadd.f32 %v53, %v197
    %v199 = vpop.f32.mrf.mxu0
    %200 = vmatprep.mubr.f32.mxu0 0.0
    %201 = vmatmul.mubr.f32.gmra.mxu0 %v75
    %v202 = vpop.f32.mrf.mxu0
    %v203 = vadd.f32 %v58, %v202
    %v204 = vpop.f32.mrf.mxu0
    %205 = vmatprep.mubr.f32.mxu0 0.0
    %206 = vmatmul.mubr.f32.gmra.mxu0 %v78
    %v207 = vpop.f32.mrf.mxu0
    %v208 = vadd.f32 %v63, %v207
    %v209 = vpop.f32.mrf.mxu0
    %210 = vmatprep.mubr.f32.mxu0 0.0
    %211 = vmatmul.mubr.f32.gmra.mxu0 %v81
    %v212 = vpop.f32.mrf.mxu0
    %v213 = vadd.f32 %v68, %v212
    %v214 = vpop.f32.mrf.mxu0
    %215 = vdwg.mxu0
    %v216 = vtanh.pop %v198
    %v217 = vtanh.pop %v203
    %v218 = vtanh.pop %v208
    %v219 = vtanh.pop %v213
    %v220 = vld [vmem:[%s3] sm:$0xff]
    %v221 = vld [vmem:[%s3 + $0x8] sm:$0xff]
    %v222 = vld [vmem:[%s3 + $0x10] sm:$0xff]
    %v223 = vld [vmem:[%s3 + $0x18] sm:$0xff]
    %v224 = vld [vmem:[%s4] sm:$0xff]
    %v225 = vld [vmem:[%s4 + $0x8] sm:$0xff]
    %v226 = vld [vmem:[%s4 + $0x10] sm:$0xff]
    %v227 = vld [vmem:[%s4 + $0x18] sm:$0xff]
    %229 = vset.pattern.permute.xlu0 0
    %230 = vperm.xlu0 %229, %v224
    %v231 = vpop.permute.xlu0 %230
    %234 = vset.pattern.permute.xlu0 0
    %235 = vperm.xlu0 %234, %v225
    %v236 = vpop.permute.xlu0 %235
    %239 = vset.pattern.permute.xlu0 0
    %240 = vperm.xlu0 %239, %v226
    %v241 = vpop.permute.xlu0 %240
    %244 = vset.pattern.permute.xlu0 0
    %245 = vperm.xlu0 %244, %v227
    %v246 = vpop.permute.xlu0 %245
    %vm248 = vcmask 261120
    %v250 = vsel %vm248, %v220, 0
    %v253 = vsel %vm248, %v221, 0
    %v256 = vsel %vm248, %v222, 0
    %v259 = vsel %vm248, %v223, 0
    %261 = vmatprep.subr.mxu0 0.0
    %262 = vmatpush1.msra.mxu0 0.0
    %263 = vmatprep.subr.mxu0 0.0
    %264 = vmatpush1.msra.mxu0 0.0
    %265 = vmatprep.subr.mxu0 0.0
    %266 = vmatpush1.msra.mxu0 0.0
    %267 = vmatprep.subr.mxu0 0.0
    %268 = vmatpush1.msra.mxu0 0.0
    %269 = vmatprep.subr.mxu0 0.0
    %270 = vmatpush1.msra.mxu0 0.0
    %271 = vmatprep.subr.mxu0 0.0
    %272 = vmatpush1.msra.mxu0 0.0
    %273 = vmatprep.subr.mxu0 0.0
    %274 = vmatpush1.msra.mxu0 0.0
    %275 = vmatprep.subr.mxu0 0.0
    %276 = vmatpush1.msra.mxu0 0.0
    %277 = vmatprep.subr.mxu0 0.0
    %278 = vmatpush1.msra.mxu0 0.0
    %279 = vmatprep.subr.mxu0 0.0
    %280 = vmatpush1.msra.mxu0 0.0
    %281 = vmatprep.subr.mxu0 0.0
    %282 = vmatpush1.msra.mxu0 0.0
    %283 = vmatprep.subr.mxu0 0.0
    %284 = vmatpush1.msra.mxu0 0.0
    %285 = vmatprep.subr.mxu0 0.0
    %286 = vmatpush1.msra.mxu0 %v219
    %287 = vmatprep.subr.mxu0 0.0
    %288 = vmatpush1.msra.mxu0 %v218
    %289 = vmatprep.subr.mxu0 0.0
    %290 = vmatpush1.msra.mxu0 %v217
    %291 = vmatprep.subr.mxu0 0.0
    %292 = vmatpush1.msra.mxu0 %v216
    %293 = vmatprep.subr.mxu0 0.0
    %294 = vmatpush2.msra.mxu0 0.0
    %295 = vmatprep.subr.mxu0 0.0
    %296 = vmatpush2.msra.mxu0 0.0
    %297 = vmatprep.subr.mxu0 0.0
    %298 = vmatpush2.msra.mxu0 0.0
    %299 = vmatprep.subr.mxu0 0.0
    %300 = vmatpush2.msra.mxu0 0.0
    %301 = vmatprep.subr.mxu0 0.0
    %302 = vmatpush2.msra.mxu0 0.0
    %303 = vmatprep.subr.mxu0 0.0
    %304 = vmatpush2.msra.mxu0 0.0
    %305 = vmatprep.subr.mxu0 0.0
    %306 = vmatpush2.msra.mxu0 0.0
    %307 = vmatprep.subr.mxu0 0.0
    %308 = vmatpush2.msra.mxu0 0.0
    %309 = vmatprep.subr.mxu0 0.0
    %310 = vmatpush2.msra.mxu0 0.0
    %311 = vmatprep.subr.mxu0 0.0
    %312 = vmatpush2.msra.mxu0 0.0
    %313 = vmatprep.subr.mxu0 0.0
    %314 = vmatpush2.msra.mxu0 0.0
    %315 = vmatprep.subr.mxu0 0.0
    %316 = vmatpush2.msra.mxu0 0.0
    %317 = vmatprep.subr.mxu0 0.0
    %318 = vmatpush2.msra.mxu0 0.0
    %319 = vmatprep.subr.mxu0 0.0
    %320 = vmatpush2.msra.mxu0 0.0
    %321 = vmatprep.subr.mxu0 0.0
    %322 = vmatpush2.msra.mxu0 0.0
    %323 = vmatprep.subr.mxu0 0.0
    %324 = vmatpush2.msra.mxu0 0.0
    %325 = vmatprep.mubr.f32.mxu0 0.0
    %326 = vmatmul.mubr.f32.gmra.mxu0 %v250
    %v327 = vpop.f32.mrf.mxu0
    %v328 = vadd.f32 %v231, %v327
    %v329 = vpop.f32.mrf.mxu0
    %330 = vmatprep.mubr.f32.mxu0 0.0
    %331 = vmatmul.mubr.f32.gmra.mxu0 %v253
    %v332 = vpop.f32.mrf.mxu0
    %v333 = vadd.f32 %v236, %v332
    %v334 = vpop.f32.mrf.mxu0
    %335 = vmatprep.mubr.f32.mxu0 0.0
    %336 = vmatmul.mubr.f32.gmra.mxu0 %v256
    %v337 = vpop.f32.mrf.mxu0
    %v338 = vadd.f32 %v241, %v337
    %v339 = vpop.f32.mrf.mxu0
    %340 = vmatprep.mubr.f32.mxu0 0.0
    %341 = vmatmul.mubr.f32.gmra.mxu0 %v259
    %v342 = vpop.f32.mrf.mxu0
    %v343 = vadd.f32 %v246, %v342
    %v344 = vpop.f32.mrf.mxu0
    %345 = vdwg.mxu0
    %v346 = vtanh.pop %v328
    %v347 = vtanh.pop %v333
    %v348 = vtanh.pop %v338
    %v349 = vtanh.pop %v343
    %v350 = vld [vmem:[%s5] sm:$0xff]
    %v351 = vld [vmem:[%s6] sm:$0xff]
    %353 = vset.pattern.permute.xlu0 0
    %354 = vperm.xlu0 %353, %v351
    %v355 = vpop.permute.xlu0 %354
    %v358 = vsel %vm248, %v350, 0
    %360 = vmatprep.subr.mxu0 0.0
    %361 = vmatpush1.msra.mxu0 0.0
    %362 = vmatprep.subr.mxu0 0.0
    %363 = vmatpush1.msra.mxu0 0.0
    %364 = vmatprep.subr.mxu0 0.0
    %365 = vmatpush1.msra.mxu0 0.0
    %366 = vmatprep.subr.mxu0 0.0
    %367 = vmatpush1.msra.mxu0 0.0
    %368 = vmatprep.subr.mxu0 0.0
    %369 = vmatpush1.msra.mxu0 0.0
    %370 = vmatprep.subr.mxu0 0.0
    %371 = vmatpush1.msra.mxu0 0.0
    %372 = vmatprep.subr.mxu0 0.0
    %373 = vmatpush1.msra.mxu0 0.0
    %374 = vmatprep.subr.mxu0 0.0
    %375 = vmatpush1.msra.mxu0 0.0
    %376 = vmatprep.subr.mxu0 0.0
    %377 = vmatpush1.msra.mxu0 0.0
    %378 = vmatprep.subr.mxu0 0.0
    %379 = vmatpush1.msra.mxu0 0.0
    %380 = vmatprep.subr.mxu0 0.0
    %381 = vmatpush1.msra.mxu0 0.0
    %382 = vmatprep.subr.mxu0 0.0
    %383 = vmatpush1.msra.mxu0 0.0
    %384 = vmatprep.subr.mxu0 0.0
    %385 = vmatpush1.msra.mxu0 %v349
    %386 = vmatprep.subr.mxu0 0.0
    %387 = vmatpush1.msra.mxu0 %v348
    %388 = vmatprep.subr.mxu0 0.0
    %389 = vmatpush1.msra.mxu0 %v347
    %390 = vmatprep.subr.mxu0 0.0
    %391 = vmatpush1.msra.mxu0 %v346
    %392 = vmatprep.subr.mxu0 0.0
    %393 = vmatpush2.msra.mxu0 0.0
    %394 = vmatprep.subr.mxu0 0.0
    %395 = vmatpush2.msra.mxu0 0.0
    %396 = vmatprep.subr.mxu0 0.0
    %397 = vmatpush2.msra.mxu0 0.0
    %398 = vmatprep.subr.mxu0 0.0
    %399 = vmatpush2.msra.mxu0 0.0
    %400 = vmatprep.subr.mxu0 0.0
    %401 = vmatpush2.msra.mxu0 0.0
    %402 = vmatprep.subr.mxu0 0.0
    %403 = vmatpush2.msra.mxu0 0.0
    %404 = vmatprep.subr.mxu0 0.0
    %405 = vmatpush2.msra.mxu0 0.0
    %406 = vmatprep.subr.mxu0 0.0
    %407 = vmatpush2.msra.mxu0 0.0
    %408 = vmatprep.subr.mxu0 0.0
    %409 = vmatpush2.msra.mxu0 0.0
    %410 = vmatprep.subr.mxu0 0.0
    %411 = vmatpush2.msra.mxu0 0.0
    %412 = vmatprep.subr.mxu0 0.0
    %413 = vmatpush2.msra.mxu0 0.0
    %414 = vmatprep.subr.mxu0 0.0
    %415 = vmatpush2.msra.mxu0 0.0
    %416 = vmatprep.subr.mxu0 0.0
    %417 = vmatpush2.msra.mxu0 0.0
    %418 = vmatprep.subr.mxu0 0.0
    %419 = vmatpush2.msra.mxu0 0.0
    %420 = vmatprep.subr.mxu0 0.0
    %421 = vmatpush2.msra.mxu0 0.0
    %422 = vmatprep.subr.mxu0 0.0
    %423 = vmatpush2.msra.mxu0 0.0
    %424 = vmatprep.mubr.f32.mxu0 0.0
    %425 = vmatmul.mubr.f32.gmra.mxu0 %v358
    %v426 = vpop.f32.mrf.mxu0
    %v427 = vadd.f32 %v355, %v426
    %v428 = vpop.f32.mrf.mxu0
    %429 = vdwg.mxu0
    %430 = vxpose.xlu0.b32.start [1/16] %v427, 128
    %431 = vxpose.xlu0.b32.cont [2/16] 0.0, 128
    %432 = vxpose.xlu0.b32.cont [3/16] 0.0, 128
    %433 = vxpose.xlu0.b32.cont [4/16] 0.0, 128
    %434 = vxpose.xlu0.b32.cont [5/16] 0.0, 128
    %435 = vxpose.xlu0.b32.cont [6/16] 0.0, 128
    %436 = vxpose.xlu0.b32.cont [7/16] 0.0, 128
    %437 = vxpose.xlu0.b32.cont [8/16] 0.0, 128
    %438 = vxpose.xlu0.b32.cont [9/16] 0.0, 128
    %439 = vxpose.xlu0.b32.cont [10/16] 0.0, 128
    %440 = vxpose.xlu0.b32.cont [11/16] 0.0, 128
    %441 = vxpose.xlu0.b32.cont [12/16] 0.0, 128
    %442 = vxpose.xlu0.b32.cont [13/16] 0.0, 128
    %443 = vxpose.xlu0.b32.cont [14/16] 0.0, 128
    %444 = vxpose.xlu0.b32.cont [15/16] 0.0, 128
    %445 = vxpose.xlu0.b32.end [16/16] 0.0, 128
    %v446 = vpop.trf.xlu0
    %v447 = vpop.trf.xlu0
    %v448 = vpop.trf.xlu0
    %v449 = vpop.trf.xlu0
    %v450 = vpop.trf.xlu0
    %v451 = vpop.trf.xlu0
    %v452 = vpop.trf.xlu0
    %v453 = vpop.trf.xlu0
    %v454 = vpop.trf.xlu0
    %v455 = vpop.trf.xlu0
    %v456 = vpop.trf.xlu0
    %v457 = vpop.trf.xlu0
    %v458 = vpop.trf.xlu0
    %v459 = vpop.trf.xlu0
    %v460 = vpop.trf.xlu0
    %v461 = vpop.trf.xlu0
    %vm462 = vcmask 64512
    %463 = vst.msk [vmem:[#allocation2] sm:$0xff] %vm462, %v446
    %464 = vst.msk [vmem:[#allocation2 + $0x8] sm:$0xff] %vm462, %v447
    %465 = vst.msk [vmem:[#allocation2 + $0x10] sm:$0xff] %vm462, %v448
    %466 = vst.msk [vmem:[#allocation2 + $0x18] sm:$0xff] %vm462, %v449
    %467 = vst.msk [vmem:[#allocation2 + $0x20] sm:$0xff] %vm462, %v450
    %468 = vst.msk [vmem:[#allocation2 + $0x28] sm:$0xff] %vm462, %v451
    %469 = vst.msk [vmem:[#allocation2 + $0x30] sm:$0xff] %vm462, %v452
    %470 = vst.msk [vmem:[#allocation2 + $0x38] sm:$0xff] %vm462, %v453
    %471 = vst.msk [vmem:[#allocation2 + $0x40] sm:$0xff] %vm462, %v454
    %472 = vst.msk [vmem:[#allocation2 + $0x48] sm:$0xff] %vm462, %v455
    %473 = vst.msk [vmem:[#allocation2 + $0x50] sm:$0xff] %vm462, %v456
    %474 = vst.msk [vmem:[#allocation2 + $0x58] sm:$0xff] %vm462, %v457
    %475 = vst.msk [vmem:[#allocation2 + $0x60] sm:$0xff] %vm462, %v458
    %476 = vst.msk [vmem:[#allocation2 + $0x68] sm:$0xff] %vm462, %v459
    %477 = vst.msk [vmem:[#allocation2 + $0x70] sm:$0xff] %vm462, %v460
    %478 = vst.msk [vmem:[#allocation2 + $0x78] sm:$0xff] %vm462, %v461
    // Predicated region
    $region30: #{tpu_custom_call.1} parent=1 // pred_check
      _
    $region31: #{tpu_custom_call.1} parent=1 // pred_check_branch
      %480 = sbr.rel (0) target = $region33
    $region32: #{tpu_custom_call.1} parent=1 // pred_region
      // Predicated region
      $region34: #{tpu_custom_call.1} parent=32 // pred_check
        _
      $region35: #{tpu_custom_call.1} parent=32 // pred_check_branch
        %482 = sbr.rel (0) target = $region37
      $region36: #{tpu_custom_call.1} parent=32 // pred_region
        // Predicated region
        $region38: #{tpu_custom_call.1} parent=36 // pred_check
          _
        $region39: #{tpu_custom_call.1} parent=36 // pred_check_branch
          %484 = sbr.rel (0) target = $region41
        $region40: #{tpu_custom_call.1} parent=36 // pred_region
          // Predicated region
          $region53: #{tpu_custom_call.1} parent=40 // pred_check
            _
          $region54: #{tpu_custom_call.1} parent=40 // pred_check_branch
            %502 = sbr.rel (0) target = $region56
          $region55: #{tpu_custom_call.1} parent=40 // pred_region
            loop: start=0, step=1, limit=1
            $region57: #{tpu_custom_call.1} parent=55 // loop_pre_header
              _
            $region58: #{tpu_custom_call.1} parent=55 // loop_header
              %s504 = sphi 0, %s508
              %p505 = scmp.ge.s32.totalorder %s504, 1
              %s509 = sphi [#allocation2], [#allocation2]
              %s510 = sphi %s7, %s7
            $region59: #{tpu_custom_call.1} parent=55 // loop_header_branch
              %507 = sbr.rel (%p505) target = $region63
            $region60: #{tpu_custom_call.1} parent=55 // loop_body
              %v511 = vld [vmem:[%s509] sm:$0xff]
              %512 = vst [vmem:[%s510] sm:$0xff] %v511
              %v513 = vld [vmem:[%s509 + $0x8] sm:$0xff]
              %514 = vst [vmem:[%s510 + $0x8] sm:$0xff] %v513
            $region61: #{tpu_custom_call.1} parent=55 // loop_footer
              %s508 = sadd.s32 1, %s504
            $region62: #{tpu_custom_call.1} parent=55 // loop_footer_branch
              %503 = sbr.rel target = $region58
            $region63: #{tpu_custom_call.1} parent=55 // loop_exit
              _
          $region56: #{tpu_custom_call.1} parent=40 // pred_fallthru
            _
          // Predicated region
          $region64: #{tpu_custom_call.1} parent=40 // pred_check
            _
          $region65: #{tpu_custom_call.1} parent=40 // pred_check_branch
            %516 = sbr.rel target = $region67
          $region66: #{tpu_custom_call.1} parent=40 // pred_region
            _
          $region67: #{tpu_custom_call.1} parent=40 // pred_fallthru
            _
        $region41: #{tpu_custom_call.1} parent=36 // pred_fallthru
          _
        // Predicated region
        $region42: #{tpu_custom_call.1} parent=36 // pred_check
          _
        $region43: #{tpu_custom_call.1} parent=36 // pred_check_branch
          %486 = sbr.rel target = $region45
        $region44: #{tpu_custom_call.1} parent=36 // pred_region
          %s488 = ssub.s32 256, 1
          loop: start=0, step=1, limit=1
          $region46: #{tpu_custom_call.1} parent=44 // loop_pre_header
            _
          $region47: #{tpu_custom_call.1} parent=44 // loop_header
            %s490 = sphi 0, %s494
            %p491 = scmp.ge.s32.totalorder %s490, 1
            %s495 = sphi [#allocation2], [#allocation2]
            %s496 = sphi %s7, %s7
          $region48: #{tpu_custom_call.1} parent=44 // loop_header_branch
            %493 = sbr.rel (%p491) target = $region52
          $region49: #{tpu_custom_call.1} parent=44 // loop_body
            %v497 = vld [vmem:[%s495] sm:%s488]
            %498 = vst [vmem:[%s496] sm:%s488] %v497
            %v499 = vld [vmem:[%s495 + $0x8] sm:%s488]
            %500 = vst [vmem:[%s496 + $0x8] sm:%s488] %v499
          $region50: #{tpu_custom_call.1} parent=44 // loop_footer
            %s494 = sadd.s32 1, %s490
          $region51: #{tpu_custom_call.1} parent=44 // loop_footer_branch
            %489 = sbr.rel target = $region47
          $region52: #{tpu_custom_call.1} parent=44 // loop_exit
            _
        $region45: #{tpu_custom_call.1} parent=36 // pred_fallthru
          _
      $region37: #{tpu_custom_call.1} parent=32 // pred_fallthru
        _
      %517 = vnop
    $region33: #{tpu_custom_call.1} parent=1 // pred_fallthru
      _
    // Predicated region
    $region68: #{tpu_custom_call.1} parent=1 // pred_check
      _
    $region69: #{tpu_custom_call.1} parent=1 // pred_check_branch
      %519 = sbr.rel (0) target = $region71
    $region70: #{tpu_custom_call.1} parent=1 // pred_region
      _
    $region71: #{tpu_custom_call.1} parent=1 // pred_fallthru
      _

</llo_original>
